<compile_context>
chip_gen: v7x
topology: tpu7x:2x2x1
jax: 0.10.0
libtpu: 0.0.40
codegen_flags: <defaults>
</compile_context>

<pallas_src>
import jax
import jax.numpy as jnp
from jax.experimental import pallas as pl
from jax.experimental.pallas import tpu as pltpu

_LANE = 128


def _front_mlp_kernel(x_ref, w1_ref, b1_ref, w2_ref, b2_ref, h2_ref):
    # TODO(synk): dropout is identity in eval mode; no RNG masking applied.
    x = x_ref[...].astype(jnp.bfloat16)                                   # (1, d_in)
    h1 = jnp.dot(x, w1_ref[...], preferred_element_type=jnp.float32) + b1_ref[...]
    h1 = jnp.maximum(h1, 0.0).astype(jnp.bfloat16)                        # ReLU
    h2 = jnp.dot(h1, w2_ref[...], preferred_element_type=jnp.float32) + b2_ref[...]
    h2 = jnp.maximum(h2, 0.0)                                             # ReLU
    h2_ref[...] = h2.astype(h2_ref.dtype)                                 # (1, L2) bf16


def _vocab_proj_kernel(h2_ref, w3_ref, b3_ref, o_ref):
    # Dominant matmul: (1, L2) @ (L2, TN) for the current vocab tile.
    out = jnp.dot(h2_ref[...], w3_ref[...], preferred_element_type=jnp.float32)
    o_ref[...] = (out + b3_ref[...]).astype(o_ref.dtype)


def _pick_tn(vocab_size, requested=None):
    """Lane-dense vocab tile width.

    Targets ~8192 lanes (>=2 MiB bf16 w3 tile for L2=128) to amortize the per-step
    pipeline overhead, but keeps >= 4 tiles when the vocab allows it (v7x megacore
    + pipelining) and prefers a tn that divides the 128-rounded vocab (no pad/slice).
    """
    if requested is not None:
        assert requested > 0 and requested % _LANE == 0, \
            "tn must be a positive multiple of 128"
        return requested
    vp = pl.cdiv(vocab_size, _LANE) * _LANE
    target = 8192
    if vp >= 4 * _LANE:
        cap = max(_LANE, (vp // 4) // _LANE * _LANE)   # keep >= 4 tiles
    else:
        cap = _LANE
    tn = max(_LANE, min(target, cap, vp))
    while vp % tn != 0:                                # prefer exact division
        tn -= _LANE
    return tn


def selection_ngram_mlp(x, params, *, tn=None):
    """x: any shape with (n-1)*input_size elements (flattened like x.view(1,-1)).

    params = (w1, b1, w2, b2, w3, b3) with weights (in, out) bf16, biases (1, out) f32.
    tn: vocab tile width (lanes, multiple of 128); default picked by _pick_tn.
    """
    w1, b1, w2, b2, w3, b3 = params
    x_flat = x.reshape(1, -1)                      # keep native dtype; cast in-kernel
    d_in = x_flat.shape[1]
    assert w1.shape[0] == d_in, "input size mismatch with linear1"
    l1 = w1.shape[1]
    l2 = w2.shape[1]
    vocab_size = w3.shape[1]

    tn = _pick_tn(vocab_size, tn)
    n_tiles = pl.cdiv(vocab_size, tn)
    vocab_p = n_tiles * tn
    if vocab_p != vocab_size:
        # Rarely taken with the default tn (vocab already a multiple of 128).
        # For production, pad w3/b3 once at init instead of per call.
        w3 = jnp.pad(w3, ((0, 0), (0, vocab_p - vocab_size)))
        b3 = jnp.pad(b3, ((0, 0), (0, vocab_p - vocab_size)))

    bytes_per = {jnp.float32.dtype: 4, jnp.bfloat16.dtype: 2}

    # --- Phase 1: tiny front MLP, computed once (hoisted out of the vocab grid). ---
    h2 = pl.pallas_call(
        _front_mlp_kernel,
        out_shape=jax.ShapeDtypeStruct((1, l2), jnp.bfloat16),
    )(x_flat, w1, b1, w2, b2)

    # --- Phase 2: w3-streaming vocab projection over a 1-D "parallel" grid. ---
    # Actual VMEM footprint (x2 for Pallas double buffers) + margin; capped at the
    # v7x scoped default (32 MiB) -- physical VMEM there is only 64 MiB per TC.
    vmem_bytes = 2 * (
        l2 * 2                     # h2 (resident)
        + l2 * tn * 2              # w3 tile (bf16)
        + tn * 4                   # b3 tile
        + tn * 4                   # out tile
    ) + (2 << 20)
    vmem_bytes = int(min(max(vmem_bytes, 4 << 20), 32 << 20))

    # Advisory cost estimate for XLA's scheduler around this mem-bound call.
    flops = 2 * l2 * vocab_p + vocab_p
    bytes_accessed = (
        l2 * 2 * n_tiles           # h2 re-read per tile (tiny)
        + w3.size * 2 + b3.size * 4
        + vocab_p * 4              # output
    )

    out = pl.pallas_call(
        _vocab_proj_kernel,
        out_shape=jax.ShapeDtypeStruct((1, vocab_p), jnp.float32),
        grid=(n_tiles,),
        in_specs=[
            pl.BlockSpec((1, l2), lambda j: (0, 0)),     # h2 : VMEM-resident
            pl.BlockSpec((l2, tn), lambda j: (0, j)),    # w3 : streamed per tile
            pl.BlockSpec((1, tn), lambda j: (0, j)),     # b3 : streamed per tile
        ],
        out_specs=pl.BlockSpec((1, tn), lambda j: (0, j)),
        compiler_params=pltpu.CompilerParams(
            dimension_semantics=("parallel",),
            vmem_limit_bytes=vmem_bytes,
        ),
        cost_estimate=pl.CostEstimate(
            flops=flops, transcendentals=0, bytes_accessed=bytes_accessed
        ),
    )(h2, w3, b3)

    if vocab_p != vocab_size:
        out = out[:, :vocab_size]
    return out


def init_params(key, vocab_size, input_size, linear_1_out=256, linear_2_out=128, n=5):
    """PyTorch-style uniform(-1/sqrt(fan_in), 1/sqrt(fan_in)) init.

    Weights are returned transposed to (in_features, out_features) and cast to
    bfloat16 (halves HBM traffic for this DMA-bound kernel); biases stay f32."""
    d_in = (n - 1) * input_size
    dims = [(d_in, linear_1_out), (linear_1_out, linear_2_out), (linear_2_out, vocab_size)]
    params = []
    for (fan_in, fan_out) in dims:
        key, kw, kb = jax.random.split(key, 3)
        bound = 1.0 / jnp.sqrt(jnp.float32(fan_in))
        w = jax.random.uniform(kw, (fan_in, fan_out), jnp.float32, -bound, bound)
        b = jax.random.uniform(kb, (1, fan_out), jnp.float32, -bound, bound)
        params += [w.astype(jnp.bfloat16), b]
    return tuple(params)


def _reference(x, params):
    """Same numerics as the kernels: bf16 operands, f32 accumulation."""
    w1, b1, w2, b2, w3, b3 = params
    h = x.reshape(1, -1).astype(jnp.bfloat16)
    h = jnp.maximum(jnp.dot(h, w1, preferred_element_type=jnp.float32) + b1, 0.0)
    h = h.astype(jnp.bfloat16)
    h = jnp.maximum(jnp.dot(h, w2, preferred_element_type=jnp.float32) + b2, 0.0)
    h = h.astype(jnp.bfloat16)
    return jnp.dot(h, w3, preferred_element_type=jnp.float32) + b3


if __name__ == "__main__":
    # Small, forward-consistent shapes: n=5, input_size=32 -> flattened (1, 128).
    vocab_size = 1024
    input_size = 32
    n = 5

    key = jax.random.PRNGKey(0)
    key, kx = jax.random.split(key)
    # The n-gram input: (n-1) context vectors of size input_size each.
    x = jax.random.normal(kx, (n - 1, input_size), jnp.float32)

    params = init_params(key, vocab_size, input_size, linear_1_out=256,
                         linear_2_out=128, n=n)

    # Default tn picker gives tn=256 / grid=(4,) at this small vocab (keeps >=4
    # tiles); production vocabs (>=32K) would get tn up to 8192.
    out = jax.block_until_ready(selection_ngram_mlp(x, params))

    ref = _reference(x, params)
    assert out.shape == (1, vocab_size), out.shape
    assert jnp.allclose(out, ref, atol=1e-2, rtol=1e-2), "mismatch vs reference"

    print("KERNEL_OK")
</pallas_src>

<mosaic_0001>
module attributes {stable_mosaic.version = 11 : i64} {
  func.func @_front_mlp_kernel(%arg0: memref<1x128xf32, #tpu.memory_space<vmem>>, %arg1: memref<128x256xbf16, #tpu.memory_space<vmem>>, %arg2: memref<1x256xf32, #tpu.memory_space<vmem>>, %arg3: memref<256x128xbf16, #tpu.memory_space<vmem>>, %arg4: memref<1x128xf32, #tpu.memory_space<vmem>>, %arg5: memref<1x128xbf16, #tpu.memory_space<vmem>>) attributes {dimension_semantics = [], scalar_prefetch = 0 : i64, scratch_operands = 0 : i64, tpu.core_type = #tpu.core_type<tc>} {
    %c0 = arith.constant 0 : index
    %c0_0 = arith.constant 0 : index
    %0 = vector.load %arg0[%c0, %c0_0] : memref<1x128xf32, #tpu.memory_space<vmem>>, vector<1x128xf32>
    %1 = arith.truncf %0 : vector<1x128xf32> to vector<1x128xbf16>
    %c0_1 = arith.constant 0 : index
    %c0_2 = arith.constant 0 : index
    %2 = vector.load %arg1[%c0_1, %c0_2] : memref<128x256xbf16, #tpu.memory_space<vmem>>, vector<128x256xbf16>
    %cst = arith.constant dense<0.000000e+00> : vector<1x256xf32>
    %3 = tpu.matmul %1, %2, %cst {dimension_numbers = #tpu.dot_dimension_numbers<[1], [0], [0], [1], [0, 0, 1, 1], [], []>} : vector<1x128xbf16>, vector<128x256xbf16>, vector<1x256xf32> -> vector<1x256xf32>
    %c0_3 = arith.constant 0 : index
    %c0_4 = arith.constant 0 : index
    %4 = vector.load %arg2[%c0_3, %c0_4] : memref<1x256xf32, #tpu.memory_space<vmem>>, vector<1x256xf32>
    %5 = arith.addf %3, %4 : vector<1x256xf32>
    %cst_5 = arith.constant 0.000000e+00 : f32
    %6 = vector.broadcast %cst_5 : f32 to vector<1x256xf32>
    %7 = arith.maximumf %5, %6 : vector<1x256xf32>
    %8 = arith.truncf %7 : vector<1x256xf32> to vector<1x256xbf16>
    %c0_6 = arith.constant 0 : index
    %c0_7 = arith.constant 0 : index
    %9 = vector.load %arg3[%c0_6, %c0_7] : memref<256x128xbf16, #tpu.memory_space<vmem>>, vector<256x128xbf16>
    %cst_8 = arith.constant dense<0.000000e+00> : vector<1x128xf32>
    %10 = tpu.matmul %8, %9, %cst_8 {dimension_numbers = #tpu.dot_dimension_numbers<[1], [0], [0], [1], [0, 0, 1, 1], [], []>} : vector<1x256xbf16>, vector<256x128xbf16>, vector<1x128xf32> -> vector<1x128xf32>
    %c0_9 = arith.constant 0 : index
    %c0_10 = arith.constant 0 : index
    %11 = vector.load %arg4[%c0_9, %c0_10] : memref<1x128xf32, #tpu.memory_space<vmem>>, vector<1x128xf32>
    %12 = arith.addf %10, %11 : vector<1x128xf32>
    %cst_11 = arith.constant 0.000000e+00 : f32
    %13 = vector.broadcast %cst_11 : f32 to vector<1x128xf32>
    %14 = arith.maximumf %12, %13 : vector<1x128xf32>
    %15 = arith.truncf %14 : vector<1x128xf32> to vector<1x128xbf16>
    %c0_12 = arith.constant 0 : index
    %c0_13 = arith.constant 0 : index
    %16 = vector.load %arg5[%c0_12, %c0_13] : memref<1x128xbf16, #tpu.memory_space<vmem>>, vector<1x128xbf16>
    tpu.vector_store %arg5[%c0_12, %c0_13], %15 {strides = array<i32>} : memref<1x128xbf16, #tpu.memory_space<vmem>>, vector<1x128xbf16>,
    return
  }
}

</mosaic_0001>

<llo_original>
// kernel: tpu_custom_call.1
$region0: #{tpu_custom_call.1}
  #allocation0 [shape = 'u32[]', space=smem, size = 0x4, offset = 0x4, fixed_abs, tag = 'smem constant byte address 0x4 - core index']
  #allocation1 [shape = 'u32[144,128]{1,0:T(1,128)}', space=vmem, size = 0x12000, scoped, tag = 'internal scratch']
  %s0 = inlined_call_operand.hbm [shape: f32[1,128], index: 0, kind: input, shape index: {}]
  %s1 = inlined_call_operand.hbm [shape: bf16[128,256], index: 1, kind: input, shape index: {}]
  %s2 = inlined_call_operand.vmem [shape: f32[1,256], index: 2, kind: input, shape index: {}]
  %s3 = inlined_call_operand.hbm [shape: bf16[256,128], index: 3, kind: input, shape index: {}]
  %s4 = inlined_call_operand.vmem [shape: f32[1,128], index: 4, kind: input, shape index: {}]
  %s5 = inlined_call_operand.hbm [shape: bf16[1,128], index: 5, kind: output, shape index: {}]
  %s6 = sld [smem:[#allocation0]]
  $region42: #{tpu_custom_call.1} parent=0
    _
  %s8 = ssub.s32 1, %s6
  %s9 = scalar_select 0, %s8, %s6
  $region1: #{tpu_custom_call.1} parent=0
    #allocation2 [shape = 'u8[512]{0}', space=vmem, size = 0x400, scoped, tag = 'input window, operand 0, single buffered']
    #allocation3 [shape = 's32[1]{0}', space=sflag, size = 0x4, scoped, tag = 'scoped memory for tpu_custom_call.1']
    #allocation4 [shape = 's32[1]{0}', space=sflag, size = 0x4, scoped, tag = 'scoped memory for tpu_custom_call.1']
    #allocation5 [shape = 'u8[65536]{0}', space=vmem, size = 0x10000, scoped, tag = 'input window, operand 1, single buffered']
    #allocation6 [shape = 's32[1]{0}', space=sflag, size = 0x4, scoped, tag = 'scoped memory for tpu_custom_call.1']
    #allocation7 [shape = 'u8[65536]{0}', space=vmem, size = 0x10000, scoped, tag = 'input window, operand 3, single buffered']
    #allocation8 [shape = 'u8[512]{0}', space=vmem, size = 0x400, scoped, tag = 'output window, operand 0, single buffered']
    %10 = vsyncpa [#allocation3], 0
    %11 = vsyncpa [#allocation6], 0
    %12 = vsyncpa [#allocation4], 0
    // Predicated region
    $region2: #{tpu_custom_call.1} parent=1 // pred_check
      _
    $region3: #{tpu_custom_call.1} parent=1 // pred_check_branch
      %14 = sbr.rel (0) target = $region5
    $region4: #{tpu_custom_call.1} parent=1 // pred_region
      %s16 = ssub.s32 16, 16
      %17 = vsyncadd [#allocation3], %s16
      %s19 = sshll.u32 [#allocation2], 4
      %s20 = int_to_ptr.vmem [resolvable:$true] %s19
      %22 = dma.hbm_to_vmem [thread:$0]  %s0, 16, %s20, [#allocation3]
    $region5: #{tpu_custom_call.1} parent=1 // pred_fallthru
      _
    // Predicated region
    $region6: #{tpu_custom_call.1} parent=1 // pred_check
      _
    $region7: #{tpu_custom_call.1} parent=1 // pred_check_branch
      %24 = sbr.rel (0) target = $region9
    $region8: #{tpu_custom_call.1} parent=1 // pred_region
      %s26 = ssub.s32 2048, 2048
      %27 = vsyncadd [#allocation6], %s26
      %s28 = sshll.u32 [#allocation5], 4
      %s29 = int_to_ptr.vmem [resolvable:$true] %s28
      %34 = dma.hbm_to_vmem [thread:$0]  %s1, 2048, %s29, [#allocation6], 128, 128, 8
    $region9: #{tpu_custom_call.1} parent=1 // pred_fallthru
      _
    // Predicated region
    $region10: #{tpu_custom_call.1} parent=1 // pred_check
      _
    $region11: #{tpu_custom_call.1} parent=1 // pred_check_branch
      %36 = sbr.rel (0) target = $region13
    $region12: #{tpu_custom_call.1} parent=1 // pred_region
      _
    $region13: #{tpu_custom_call.1} parent=1 // pred_fallthru
      _
    // Predicated region
    $region14: #{tpu_custom_call.1} parent=1 // pred_check
      _
    $region15: #{tpu_custom_call.1} parent=1 // pred_check_branch
      %38 = sbr.rel (0) target = $region17
    $region16: #{tpu_custom_call.1} parent=1 // pred_region
      %s40 = ssub.s32 2048, 2048
      %41 = vsyncadd [#allocation6], %s40
      %s42 = sshll.u32 [#allocation7], 4
      %s43 = int_to_ptr.vmem [resolvable:$true] %s42
      %48 = dma.hbm_to_vmem [thread:$0]  %s3, 2048, %s43, [#allocation6], 64, 64, 4
    $region17: #{tpu_custom_call.1} parent=1 // pred_fallthru
      _
    // Predicated region
    $region18: #{tpu_custom_call.1} parent=1 // pred_check
      _
    $region19: #{tpu_custom_call.1} parent=1 // pred_check_branch
      %50 = sbr.rel (0) target = $region21
    $region20: #{tpu_custom_call.1} parent=1 // pred_region
      _
    $region21: #{tpu_custom_call.1} parent=1 // pred_fallthru
      _
    // Predicated region
    $region22: #{tpu_custom_call.1} parent=1 // pred_check
      _
    $region23: #{tpu_custom_call.1} parent=1 // pred_check_branch
      %52 = sbr.rel (0) target = $region25
    $region24: #{tpu_custom_call.1} parent=1 // pred_region
      %53 = dma.done [#allocation3], 16
    $region25: #{tpu_custom_call.1} parent=1 // pred_fallthru
      _
    // Predicated region
    $region26: #{tpu_custom_call.1} parent=1 // pred_check
      _
    $region27: #{tpu_custom_call.1} parent=1 // pred_check_branch
      %55 = sbr.rel (0) target = $region29
    $region28: #{tpu_custom_call.1} parent=1 // pred_region
      %56 = dma.done [#allocation6], 2048
    $region29: #{tpu_custom_call.1} parent=1 // pred_fallthru
      _
    // Predicated region
    $region30: #{tpu_custom_call.1} parent=1 // pred_check
      _
    $region31: #{tpu_custom_call.1} parent=1 // pred_check_branch
      %58 = sbr.rel (0) target = $region33
    $region32: #{tpu_custom_call.1} parent=1 // pred_region
      %59 = dma.done [#allocation6], 2048
    $region33: #{tpu_custom_call.1} parent=1 // pred_fallthru
      _
    %v61 = vld [vmem:[#allocation2] sm:$0x1]
    %v62 = vpack.c.bf16 %v61, %v61
    %v63 = vld [vmem:[#allocation5] sm:$0xff]
    %v64 = vld [vmem:[#allocation5 + $0x8] sm:$0xff]
    %v65 = vld [vmem:[#allocation5 + $0x10] sm:$0xff]
    %v66 = vld [vmem:[#allocation5 + $0x18] sm:$0xff]
    %v67 = vld [vmem:[#allocation5 + $0x20] sm:$0xff]
    %v68 = vld [vmem:[#allocation5 + $0x28] sm:$0xff]
    %v69 = vld [vmem:[#allocation5 + $0x30] sm:$0xff]
    %v70 = vld [vmem:[#allocation5 + $0x38] sm:$0xff]
    %v71 = vld [vmem:[#allocation5 + $0x40] sm:$0xff]
    %v72 = vld [vmem:[#allocation5 + $0x48] sm:$0xff]
    %v73 = vld [vmem:[#allocation5 + $0x50] sm:$0xff]
    %v74 = vld [vmem:[#allocation5 + $0x58] sm:$0xff]
    %v75 = vld [vmem:[#allocation5 + $0x60] sm:$0xff]
    %v76 = vld [vmem:[#allocation5 + $0x68] sm:$0xff]
    %v77 = vld [vmem:[#allocation5 + $0x70] sm:$0xff]
    %v78 = vld [vmem:[#allocation5 + $0x78] sm:$0xff]
    %v79 = vld [vmem:[%s2] sm:$0x3]
    %v96 = vunpack.c.l.b16 %v63
    %v97 = vunpack.c.h.b16 %v63
    %v98 = vunpack.c.l.b16 %v64
    %v99 = vunpack.c.h.b16 %v64
    %v100 = vunpack.c.l.b16 %v65
    %v101 = vunpack.c.h.b16 %v65
    %v102 = vunpack.c.l.b16 %v66
    %v103 = vunpack.c.h.b16 %v66
    %v104 = vunpack.c.l.b16 %v67
    %v105 = vunpack.c.h.b16 %v67
    %v106 = vunpack.c.l.b16 %v68
    %v107 = vunpack.c.h.b16 %v68
    %v108 = vunpack.c.l.b16 %v69
    %v109 = vunpack.c.h.b16 %v69
    %v110 = vunpack.c.l.b16 %v70
    %v111 = vunpack.c.h.b16 %v70
    %v112 = vunpack.c.l.b16 %v71
    %v113 = vunpack.c.h.b16 %v71
    %v114 = vunpack.c.l.b16 %v72
    %v115 = vunpack.c.h.b16 %v72
    %v116 = vunpack.c.l.b16 %v73
    %v117 = vunpack.c.h.b16 %v73
    %v118 = vunpack.c.l.b16 %v74
    %v119 = vunpack.c.h.b16 %v74
    %v120 = vunpack.c.l.b16 %v75
    %v121 = vunpack.c.h.b16 %v75
    %v122 = vunpack.c.l.b16 %v76
    %v123 = vunpack.c.h.b16 %v76
    %v124 = vunpack.c.l.b16 %v77
    %v125 = vunpack.c.h.b16 %v77
    %v126 = vunpack.c.l.b16 %v78
    %v127 = vunpack.c.h.b16 %v78
    %v128 = vpack.c.b16 %v98, %v96
    %v129 = vpack.c.b16 %v99, %v97
    %v130 = vpack.c.b16 %v102, %v100
    %v131 = vpack.c.b16 %v103, %v101
    %v132 = vpack.c.b16 %v106, %v104
    %v133 = vpack.c.b16 %v107, %v105
    %v134 = vpack.c.b16 %v110, %v108
    %v135 = vpack.c.b16 %v111, %v109
    %v136 = vpack.c.b16 %v114, %v112
    %v137 = vpack.c.b16 %v115, %v113
    %v138 = vpack.c.b16 %v118, %v116
    %v139 = vpack.c.b16 %v119, %v117
    %v140 = vpack.c.b16 %v122, %v120
    %v141 = vpack.c.b16 %v123, %v121
    %v142 = vpack.c.b16 %v126, %v124
    %v143 = vpack.c.b16 %v127, %v125
    %v161 = vlaneseq
    %v162 = vshrl.u32 %v161, 7
    %v163 = vsub.s32 0, %v162
    %v164 = vrot.slane %v79, %v163
    %v165 = vlaneseq
    %v166 = vshrl.u32 %v165, 7
    %v167 = vsub.s32 1, %v166
    %v168 = vrot.slane %v79, %v167
    %171 = vmatprep.subr.bf16.mxu0 %v129
    %172 = vmatpush1.bf16.msra.mxu0 %v128
    %173 = vmatprep.subr.bf16.mxu0 %v131
    %174 = vmatpush1.bf16.msra.mxu0 %v130
    %175 = vmatprep.subr.bf16.mxu0 %v133
    %176 = vmatpush1.bf16.msra.mxu0 %v132
    %177 = vmatprep.subr.bf16.mxu0 %v135
    %178 = vmatpush1.bf16.msra.mxu0 %v134
    %179 = vmatprep.subr.bf16.mxu0 %v137
    %180 = vmatpush1.bf16.msra.mxu0 %v136
    %181 = vmatprep.subr.bf16.mxu0 %v139
    %182 = vmatpush1.bf16.msra.mxu0 %v138
    %183 = vmatprep.subr.bf16.mxu0 %v141
    %184 = vmatpush1.bf16.msra.mxu0 %v140
    %185 = vmatprep.subr.bf16.mxu0 %v143
    %186 = vmatpush1.bf16.msra.mxu0 %v142
    %187 = vmatprep.subr.bf16.mxu0 0
    %188 = vmatpush1.bf16.msra.mxu0 0
    %189 = vmatprep.subr.bf16.mxu0 0
    %190 = vmatpush1.bf16.msra.mxu0 0
    %191 = vmatprep.subr.bf16.mxu0 0
    %192 = vmatpush1.bf16.msra.mxu0 0
    %193 = vmatprep.subr.bf16.mxu0 0
    %194 = vmatpush1.bf16.msra.mxu0 0
    %195 = vmatprep.subr.bf16.mxu0 0
    %196 = vmatpush1.bf16.msra.mxu0 0
    %197 = vmatprep.subr.bf16.mxu0 0
    %198 = vmatpush1.bf16.msra.mxu0 0
    %199 = vmatprep.subr.bf16.mxu0 0
    %200 = vmatpush1.bf16.msra.mxu0 0
    %201 = vmatprep.subr.bf16.mxu0 0
    %202 = vmatpush1.bf16.msra.mxu0 0
    %203 = vmatprep.mubr.bf16.mxu0 0
    %204 = vmatmul.mubr.bf16.gmra.mrb[0].mxu0 %v62
    %v205 = vpop.f32.mrb[0].mxu0
    %v206 = vadd.f32 %v164, %v205
    %v207 = vpop.f32.mrb[0].mxu0
    %v208 = vadd.f32 %v168, %v207
    %v209 = vpop.f32.mrb[0].mxu0
    %v210 = vpop.f32.mrb[0].mxu0
    %211 = vdwg.mxu0
    %v212 = vmax.f32 %v206, 0.0
    %v213 = vmax.f32 %v208, 0.0
    %v214 = vpack.c.bf16 %v212, %v212
    %v215 = vpack.c.bf16 %v213, %v213
    %v216 = vld [vmem:[#allocation7] sm:$0xf]
    %v217 = vld [vmem:[#allocation7 + $0x4] sm:$0xf]
    %v218 = vld [vmem:[#allocation7 + $0x8] sm:$0xf]
    %v219 = vld [vmem:[#allocation7 + $0xc] sm:$0xf]
    %v220 = vld [vmem:[#allocation7 + $0x10] sm:$0xf]
    %v221 = vld [vmem:[#allocation7 + $0x14] sm:$0xf]
    %v222 = vld [vmem:[#allocation7 + $0x18] sm:$0xf]
    %v223 = vld [vmem:[#allocation7 + $0x1c] sm:$0xf]
    %v224 = vld [vmem:[#allocation7 + $0x20] sm:$0xf]
    %v225 = vld [vmem:[#allocation7 + $0x24] sm:$0xf]
    %v226 = vld [vmem:[#allocation7 + $0x28] sm:$0xf]
    %v227 = vld [vmem:[#allocation7 + $0x2c] sm:$0xf]
    %v228 = vld [vmem:[#allocation7 + $0x30] sm:$0xf]
    %v229 = vld [vmem:[#allocation7 + $0x34] sm:$0xf]
    %v230 = vld [vmem:[#allocation7 + $0x38] sm:$0xf]
    %v231 = vld [vmem:[#allocation7 + $0x3c] sm:$0xf]
    %v232 = vld [vmem:[#allocation7 + $0x40] sm:$0xf]
    %v233 = vld [vmem:[#allocation7 + $0x44] sm:$0xf]
    %v234 = vld [vmem:[#allocation7 + $0x48] sm:$0xf]
    %v235 = vld [vmem:[#allocation7 + $0x4c] sm:$0xf]
    %v236 = vld [vmem:[#allocation7 + $0x50] sm:$0xf]
    %v237 = vld [vmem:[#allocation7 + $0x54] sm:$0xf]
    %v238 = vld [vmem:[#allocation7 + $0x58] sm:$0xf]
    %v239 = vld [vmem:[#allocation7 + $0x5c] sm:$0xf]
    %v240 = vld [vmem:[#allocation7 + $0x60] sm:$0xf]
    %v241 = vld [vmem:[#allocation7 + $0x64] sm:$0xf]
    %v242 = vld [vmem:[#allocation7 + $0x68] sm:$0xf]
    %v243 = vld [vmem:[#allocation7 + $0x6c] sm:$0xf]
    %v244 = vld [vmem:[#allocation7 + $0x70] sm:$0xf]
    %v245 = vld [vmem:[#allocation7 + $0x74] sm:$0xf]
    %v246 = vld [vmem:[#allocation7 + $0x78] sm:$0xf]
    %v247 = vld [vmem:[#allocation7 + $0x7c] sm:$0xf]
    %v248 = vld [vmem:[%s4] sm:$0x1]
    %v281 = vunpack.c.l.b16 %v216
    %v282 = vunpack.c.l.b16 %v217
    %v283 = vunpack.c.l.b16 %v218
    %v284 = vunpack.c.l.b16 %v219
    %v285 = vunpack.c.l.b16 %v220
    %v286 = vunpack.c.l.b16 %v221
    %v287 = vunpack.c.l.b16 %v222
    %v288 = vunpack.c.l.b16 %v223
    %v289 = vunpack.c.l.b16 %v224
    %v290 = vunpack.c.l.b16 %v225
    %v291 = vunpack.c.l.b16 %v226
    %v292 = vunpack.c.l.b16 %v227
    %v293 = vunpack.c.l.b16 %v228
    %v294 = vunpack.c.l.b16 %v229
    %v295 = vunpack.c.l.b16 %v230
    %v296 = vunpack.c.l.b16 %v231
    %v297 = vunpack.c.l.b16 %v232
    %v298 = vunpack.c.l.b16 %v233
    %v299 = vunpack.c.l.b16 %v234
    %v300 = vunpack.c.l.b16 %v235
    %v301 = vunpack.c.l.b16 %v236
    %v302 = vunpack.c.l.b16 %v237
    %v303 = vunpack.c.l.b16 %v238
    %v304 = vunpack.c.l.b16 %v239
    %v305 = vunpack.c.l.b16 %v240
    %v306 = vunpack.c.l.b16 %v241
    %v307 = vunpack.c.l.b16 %v242
    %v308 = vunpack.c.l.b16 %v243
    %v309 = vunpack.c.l.b16 %v244
    %v310 = vunpack.c.l.b16 %v245
    %v311 = vunpack.c.l.b16 %v246
    %v312 = vunpack.c.l.b16 %v247
    %v313 = vpack.c.b16 %v282, %v281
    %v314 = vpack.c.b16 %v284, %v283
    %v315 = vpack.c.b16 %v286, %v285
    %v316 = vpack.c.b16 %v288, %v287
    %v317 = vpack.c.b16 %v290, %v289
    %v318 = vpack.c.b16 %v292, %v291
    %v319 = vpack.c.b16 %v294, %v293
    %v320 = vpack.c.b16 %v296, %v295
    %v321 = vpack.c.b16 %v298, %v297
    %v322 = vpack.c.b16 %v300, %v299
    %v323 = vpack.c.b16 %v302, %v301
    %v324 = vpack.c.b16 %v304, %v303
    %v325 = vpack.c.b16 %v306, %v305
    %v326 = vpack.c.b16 %v308, %v307
    %v327 = vpack.c.b16 %v310, %v309
    %v328 = vpack.c.b16 %v312, %v311
    %345 = vmatprep.subr.bf16.mxu0 0
    %346 = vmatpush1.bf16.msra.mxu0 %v313
    %347 = vmatprep.subr.bf16.mxu0 0
    %348 = vmatpush1.bf16.msra.mxu0 %v314
    %349 = vmatprep.subr.bf16.mxu0 0
    %350 = vmatpush1.bf16.msra.mxu0 %v315
    %351 = vmatprep.subr.bf16.mxu0 0
    %352 = vmatpush1.bf16.msra.mxu0 %v316
    %353 = vmatprep.subr.bf16.mxu0 0
    %354 = vmatpush1.bf16.msra.mxu0 %v317
    %355 = vmatprep.subr.bf16.mxu0 0
    %356 = vmatpush1.bf16.msra.mxu0 %v318
    %357 = vmatprep.subr.bf16.mxu0 0
    %358 = vmatpush1.bf16.msra.mxu0 %v319
    %359 = vmatprep.subr.bf16.mxu0 0
    %360 = vmatpush1.bf16.msra.mxu0 %v320
    %361 = vmatprep.subr.bf16.mxu0 0
    %362 = vmatpush1.bf16.msra.mxu0 %v321
    %363 = vmatprep.subr.bf16.mxu0 0
    %364 = vmatpush1.bf16.msra.mxu0 %v322
    %365 = vmatprep.subr.bf16.mxu0 0
    %366 = vmatpush1.bf16.msra.mxu0 %v323
    %367 = vmatprep.subr.bf16.mxu0 0
    %368 = vmatpush1.bf16.msra.mxu0 %v324
    %369 = vmatprep.subr.bf16.mxu0 0
    %370 = vmatpush1.bf16.msra.mxu0 %v325
    %371 = vmatprep.subr.bf16.mxu0 0
    %372 = vmatpush1.bf16.msra.mxu0 %v326
    %373 = vmatprep.subr.bf16.mxu0 0
    %374 = vmatpush1.bf16.msra.mxu0 %v327
    %375 = vmatprep.subr.bf16.mxu0 0
    %376 = vmatpush1.bf16.msra.mxu0 %v328
    %377 = vmatprep.mubr.bf16.mxu0 %v215
    %378 = vmatmul.mubr.bf16.gmra.mrb[0].mxu0 %v214
    %v379 = vpop.f32.mrb[0].mxu0
    %v380 = vadd.f32 %v248, %v379
    %v381 = vpop.f32.mrb[0].mxu0
    %v382 = vpop.f32.mrb[0].mxu0
    %v383 = vpop.f32.mrb[0].mxu0
    %384 = vdwg.mxu0
    %v385 = vmax.f32 %v380, 0.0
    %v386 = vpack.c.bf16 %v385, %v385
    %vm387 = vcmask 1040384
    %vm388 = vsmask.f32 256
    %vm389 = vmand %vm387, %vm388
    %v390 = vld [vmem:[#allocation8] sm:$0x1]
    %v391 = vsel %vm389, %v386, %v390
    %392 = vst [vmem:[#allocation8] sm:$0x1] %v391
    // Predicated region
    $region34: #{tpu_custom_call.1} parent=1 // pred_check
      _
    $region35: #{tpu_custom_call.1} parent=1 // pred_check_branch
      %394 = sbr.rel (0) target = $region37
    $region36: #{tpu_custom_call.1} parent=1 // pred_region
      %s396 = ssub.s32 16, 16
      %397 = vsyncadd [#allocation4], %s396
      %s399 = sshll.u32 [#allocation8], 4
      %s400 = int_to_ptr.vmem [resolvable:$true] %s399
      %402 = dma.vmem_to_hbm [thread:$0]  %s400, 16, %s5, [#allocation4]
    $region37: #{tpu_custom_call.1} parent=1 // pred_fallthru
      _
    // Predicated region
    $region38: #{tpu_custom_call.1} parent=1 // pred_check
      _
    $region39: #{tpu_custom_call.1} parent=1 // pred_check_branch
      %404 = sbr.rel (0) target = $region41
    $region40: #{tpu_custom_call.1} parent=1 // pred_region
      %405 = dma.done [#allocation4], 16
    $region41: #{tpu_custom_call.1} parent=1 // pred_fallthru
      _
    %406 = vsyncpa [#allocation3], 1
    %407 = vsyncpa [#allocation6], 1
    %408 = vsyncpa [#allocation4], 1

</llo_original>
